<compile_context>
chip_gen: v7x
topology: tpu7x:2x2x1
jax: 0.10.0
libtpu: 0.0.40
codegen_flags: <defaults>
</compile_context>

<pallas_src>
import math

import jax
import jax.numpy as jnp
from jax.experimental import pallas as pl
from jax.experimental.pallas import tpu as pltpu


def _round_up(x, m):
    return (x + m - 1) // m * m


def _pick_divisor_tile(padded_dim, candidates=(512, 256, 128)):
    # padded_dim is always a multiple of 128, so this always returns >= 128.
    for t in candidates:
        if padded_dim >= t and padded_dim % t == 0:
            return t
    return padded_dim


# ---------------------------------------------------------------------------
# Kernels
# ---------------------------------------------------------------------------
def _bernoulli_single_block_kernel(x_ref, wt_ref, b_ref, logits_ref, probs_ref):
    # Whole problem in VMEM, single invocation (no grid).
    logits = jnp.dot(
        x_ref[...], wt_ref[...], preferred_element_type=jnp.float32
    ) + b_ref[...]
    logits_ref[...] = logits.astype(logits_ref.dtype)
    # Bernoulli(logits=x).probs == sigmoid(logits)
    probs_ref[...] = jax.nn.sigmoid(logits).astype(probs_ref.dtype)


def _bernoulli_tiled_kernel(x_ref, wt_ref, b_ref, logits_ref, probs_ref, acc_ref):
    # Grid = (M tiles, N tiles, K tiles); K is the reduction axis (last, "arbitrary").
    k = pl.program_id(2)

    @pl.when(k == 0)
    def _():
        acc_ref[...] = jnp.zeros_like(acc_ref)

    acc_ref[...] += jnp.dot(
        x_ref[...], wt_ref[...], preferred_element_type=jnp.float32
    )

    @pl.when(k == pl.num_programs(2) - 1)
    def _():
        logits = acc_ref[...] + b_ref[...]
        logits_ref[...] = logits.astype(logits_ref.dtype)
        probs_ref[...] = jax.nn.sigmoid(logits).astype(probs_ref.dtype)


# ---------------------------------------------------------------------------
# Wrappers
# ---------------------------------------------------------------------------
_SINGLE_BLOCK_VMEM_BUDGET = 8 * 1024 * 1024  # bytes of f32 operands+outputs


def _cost_estimate(Bp, Kp, Np):
    return pl.CostEstimate(
        flops=2 * Bp * Kp * Np,
        transcendentals=Bp * Np,
        bytes_accessed=4 * (Bp * Kp + Kp * Np + Np + 2 * Bp * Np),
    )


def _forward_single_block(x, wt, b2, num_outputs):
    B, K = x.shape
    Kp, Np = wt.shape
    Bp = _round_up(B, 8)
    if (B, K) != (Bp, Kp):
        x = jnp.pad(x, ((0, Bp - B), (0, Kp - K)))

    logits, probs = pl.pallas_call(
        _bernoulli_single_block_kernel,
        out_shape=(
            jax.ShapeDtypeStruct((Bp, Np), x.dtype),
            jax.ShapeDtypeStruct((Bp, Np), x.dtype),
        ),
        in_specs=[pl.BlockSpec(memory_space=pltpu.MemorySpace.VMEM)] * 3,
        out_specs=(
            pl.BlockSpec(memory_space=pltpu.MemorySpace.VMEM),
            pl.BlockSpec(memory_space=pltpu.MemorySpace.VMEM),
        ),
        cost_estimate=_cost_estimate(Bp, Kp, Np),
    )(x, wt, b2)

    if (Bp, Np) != (B, num_outputs):
        logits = logits[:B, :num_outputs]
        probs = probs[:B, :num_outputs]
    return logits, probs


def _forward_tiled(x, wt, b2, num_outputs):
    B, K = x.shape
    Kp, Np = wt.shape

    # Tile sizes: multiples of (8, 128); modest enough to fit v7x's 32 MiB
    # scoped VMEM with double-buffered inputs/outputs.
    # TODO(synk): for MXU-bound scale-up on v6e/v7x, cast x/Wt to bf16 and use
    # 256-aligned N/K tiles; kept f32 here to match the PyTorch module exactly.
    tm = 256 if B >= 256 else _round_up(B, 8)
    tn = _pick_divisor_tile(Np)
    tk = _pick_divisor_tile(Kp)
    Bp = _round_up(B, tm)

    if (B, K) != (Bp, Kp):
        x = jnp.pad(x, ((0, Bp - B), (0, Kp - K)))

    grid = (Bp // tm, Np // tn, Kp // tk)

    logits, probs = pl.pallas_call(
        _bernoulli_tiled_kernel,
        out_shape=(
            jax.ShapeDtypeStruct((Bp, Np), x.dtype),
            jax.ShapeDtypeStruct((Bp, Np), x.dtype),
        ),
        grid_spec=pltpu.PrefetchScalarGridSpec(
            num_scalar_prefetch=0,
            grid=grid,
            in_specs=[
                pl.BlockSpec((tm, tk), lambda i, j, k: (i, k)),
                pl.BlockSpec((tk, tn), lambda i, j, k: (k, j)),
                pl.BlockSpec((1, tn), lambda i, j, k: (0, j)),
            ],
            out_specs=[
                pl.BlockSpec((tm, tn), lambda i, j, k: (i, j)),
                pl.BlockSpec((tm, tn), lambda i, j, k: (i, j)),
            ],
            scratch_shapes=[pltpu.VMEM((tm, tn), jnp.float32)],
        ),
        compiler_params=pltpu.CompilerParams(
            dimension_semantics=("parallel", "parallel", "arbitrary"),
        ),
        cost_estimate=_cost_estimate(Bp, Kp, Np),
    )(x, wt, b2)

    if (Bp, Np) != (B, num_outputs):
        logits = logits[:B, :num_outputs]
        probs = probs[:B, :num_outputs]
    return logits, probs


def bernoulli_forward(x, wt_padded, bias_padded, num_outputs):
    """Pallas implementation of Bernoulli(nn.Module).forward.

    Args:
      x:           f32[B, num_inputs]
      wt_padded:   f32[Kp, Np]  transposed + lane-padded Linear weight
      bias_padded: f32[1, Np]   lane-padded bias
      num_outputs: logical output width

    Returns:
      (logits, probs): both f32[B, num_outputs] — the parameters of the
      resulting Bernoulli distribution.
    """
    B, _ = x.shape
    Kp, Np = wt_padded.shape
    Bp = _round_up(B, 8)
    total_bytes = 4 * (Bp * Kp + Kp * Np + Np + 2 * Bp * Np)
    if total_bytes <= _SINGLE_BLOCK_VMEM_BUDGET:
        return _forward_single_block(x, wt_padded, bias_padded, num_outputs)
    return _forward_tiled(x, wt_padded, bias_padded, num_outputs)


class BernoulliPallas:
    """JAX/Pallas counterpart of the PyTorch `Bernoulli` policy head."""

    def __init__(self, num_inputs, num_outputs, key):
        self.num_inputs = num_inputs
        self.num_outputs = num_outputs

        # Deterministic init mimicking nn.Linear's default:
        # U(-1/sqrt(fan_in), 1/sqrt(fan_in)) for both weight and bias.
        kw, kb = jax.random.split(key)
        bound = 1.0 / math.sqrt(num_inputs)
        self.weight = jax.random.uniform(
            kw, (num_outputs, num_inputs), jnp.float32, -bound, bound
        )
        self.bias = jax.random.uniform(
            kb, (num_outputs,), jnp.float32, -bound, bound
        )

        # Kernel-facing layout, hoisted out of the per-call hot path:
        #  - transposed to [num_inputs, num_outputs] (plain x @ Wt on the MXU)
        #  - padded so the kernel's last dims are 128-lane-dense (unmasked vst)
        Kp = _round_up(num_inputs, 128)
        Np = _round_up(num_outputs, 128)
        self.wt_padded = (
            jnp.zeros((Kp, Np), jnp.float32)
            .at[:num_inputs, :num_outputs]
            .set(self.weight.T)
        )
        self.bias_padded = (
            jnp.zeros((1, Np), jnp.float32).at[:, :num_outputs].set(self.bias)
        )

    def __call__(self, x):
        # Returns the Bernoulli distribution's parameters (logits, probs).
        # TODO(synk): sampling / log_prob of torch.distributions.Bernoulli are
        # distribution methods, not part of forward(); only the parameterizing
        # logits/probs are produced here.
        return bernoulli_forward(
            x, self.wt_padded, self.bias_padded, self.num_outputs
        )


if __name__ == "__main__":
    key = jax.random.PRNGKey(0)
    k_param, k_x, k_param2, k_x2 = jax.random.split(key, 4)

    # --- Test 1: small demo shape -> single-block (no-grid) path -------------
    batch, num_inputs, num_outputs = 8, 32, 16
    module = BernoulliPallas(num_inputs, num_outputs, k_param)
    x = jax.random.normal(k_x, (batch, num_inputs), jnp.float32)

    logits, probs = module(x)
    jax.block_until_ready(logits)
    jax.block_until_ready(probs)

    ref_logits = x @ module.weight.T + module.bias
    ref_probs = jax.nn.sigmoid(ref_logits)
    assert logits.shape == (batch, num_outputs)
    assert probs.shape == (batch, num_outputs)
    assert jnp.allclose(logits, ref_logits, atol=1e-5, rtol=1e-5)
    assert jnp.allclose(probs, ref_probs, atol=1e-5, rtol=1e-5)

    # --- Test 2: larger, ragged shape -> tiled / pipelined path --------------
    batch2, ni2, no2 = 60, 1000, 300
    module2 = BernoulliPallas(ni2, no2, k_param2)
    x2 = jax.random.normal(k_x2, (batch2, ni2), jnp.float32)

    logits2, probs2 = _forward_tiled(
        x2, module2.wt_padded, module2.bias_padded, no2
    )
    jax.block_until_ready(logits2)
    jax.block_until_ready(probs2)

    ref_logits2 = x2 @ module2.weight.T + module2.bias
    ref_probs2 = jax.nn.sigmoid(ref_logits2)
    assert logits2.shape == (batch2, no2)
    assert jnp.allclose(logits2, ref_logits2, atol=1e-4, rtol=1e-4)
    assert jnp.allclose(probs2, ref_probs2, atol=1e-4, rtol=1e-4)

    print("KERNEL_OK")
</pallas_src>

<mosaic_0001>
module attributes {stable_mosaic.version = 11 : i64} {
  func.func @_bernoulli_single_block_kernel(%arg0: memref<8x128xf32, #tpu.memory_space<vmem>>, %arg1: memref<128x128xf32, #tpu.memory_space<vmem>>, %arg2: memref<1x128xf32, #tpu.memory_space<vmem>>, %arg3: memref<8x128xf32, #tpu.memory_space<vmem>>, %arg4: memref<8x128xf32, #tpu.memory_space<vmem>>) attributes {dimension_semantics = [], scalar_prefetch = 0 : i64, scratch_operands = 0 : i64, tpu.core_type = #tpu.core_type<tc>} {
    %c0 = arith.constant 0 : index
    %c0_0 = arith.constant 0 : index
    %0 = vector.load %arg0[%c0, %c0_0] : memref<8x128xf32, #tpu.memory_space<vmem>>, vector<8x128xf32>
    %c0_1 = arith.constant 0 : index
    %c0_2 = arith.constant 0 : index
    %1 = vector.load %arg1[%c0_1, %c0_2] : memref<128x128xf32, #tpu.memory_space<vmem>>, vector<128x128xf32>
    %cst = arith.constant dense<0.000000e+00> : vector<8x128xf32>
    %2 = tpu.matmul %0, %1, %cst {dimension_numbers = #tpu.dot_dimension_numbers<[1], [0], [0], [1], [0, 0, 1, 1], [], []>} : vector<8x128xf32>, vector<128x128xf32>, vector<8x128xf32> -> vector<8x128xf32>
    %c0_3 = arith.constant 0 : index
    %c0_4 = arith.constant 0 : index
    %3 = vector.load %arg2[%c0_3, %c0_4] : memref<1x128xf32, #tpu.memory_space<vmem>>, vector<1x128xf32>
    %4 = vector.broadcast %3 : vector<1x128xf32> to vector<8x128xf32>
    %5 = arith.addf %2, %4 : vector<8x128xf32>
    %c0_5 = arith.constant 0 : index
    %c0_6 = arith.constant 0 : index
    %6 = vector.load %arg3[%c0_5, %c0_6] : memref<8x128xf32, #tpu.memory_space<vmem>>, vector<8x128xf32>
    tpu.vector_store %arg3[%c0_5, %c0_6], %5 {strides = array<i32>} : memref<8x128xf32, #tpu.memory_space<vmem>>, vector<8x128xf32>,
    %7 = arith.negf %5 : vector<8x128xf32>
    %8 = math.exp %7 : vector<8x128xf32>
    %cst_7 = arith.constant 1.000000e+00 : f32
    %9 = vector.broadcast %cst_7 : f32 to vector<8x128xf32>
    %10 = arith.addf %9, %8 : vector<8x128xf32>
    %11 = arith.divf %9, %10 : vector<8x128xf32>
    %c0_8 = arith.constant 0 : index
    %c0_9 = arith.constant 0 : index
    %12 = vector.load %arg4[%c0_8, %c0_9] : memref<8x128xf32, #tpu.memory_space<vmem>>, vector<8x128xf32>
    tpu.vector_store %arg4[%c0_8, %c0_9], %11 {strides = array<i32>} : memref<8x128xf32, #tpu.memory_space<vmem>>, vector<8x128xf32>,
    return
  }
}

</mosaic_0001>

<llo_original>
// kernel: tpu_custom_call.1
$region0: #{tpu_custom_call.1}
  #allocation0 [shape = 'u32[]', space=smem, size = 0x4, offset = 0x4, fixed_abs, tag = 'smem constant byte address 0x4 - core index']
  #allocation1 [shape = 'u32[144,128]{1,0:T(1,128)}', space=vmem, size = 0x12000, scoped, tag = 'internal scratch']
  %s0 = inlined_call_operand.hbm [shape: f32[8,128], index: 0, kind: input, shape index: {}]
  %s1 = inlined_call_operand.hbm [shape: f32[128,128], index: 1, kind: input, shape index: {}]
  %s2 = inlined_call_operand.vmem [shape: f32[1,128], index: 2, kind: input, shape index: {}]
  %s3 = inlined_call_operand.hbm [shape: f32[8,128], index: 3, kind: output, shape index: {0}]
  %s4 = inlined_call_operand.hbm [shape: f32[8,128], index: 4, kind: output, shape index: {1}]
  %5 = xla_tuple %s3, %s4
  %s6 = sld [smem:[#allocation0]]
  $region38: #{tpu_custom_call.1} parent=0
    _
  %s8 = ssub.s32 1, %s6
  %s9 = scalar_select 0, %s8, %s6
  $region1: #{tpu_custom_call.1} parent=0
    #allocation2 [shape = 'u8[4096]{0}', space=vmem, size = 0x1000, scoped, tag = 'input window, operand 0, single buffered']
    #allocation3 [shape = 's32[1]{0}', space=sflag, size = 0x4, scoped, tag = 'scoped memory for tpu_custom_call.1']
    #allocation4 [shape = 's32[1]{0}', space=sflag, size = 0x4, scoped, tag = 'scoped memory for tpu_custom_call.1']
    #allocation5 [shape = 'u8[65536]{0}', space=vmem, size = 0x10000, scoped, tag = 'input window, operand 1, single buffered']
    #allocation6 [shape = 's32[1]{0}', space=sflag, size = 0x4, scoped, tag = 'scoped memory for tpu_custom_call.1']
    #allocation7 [shape = 'u8[4096]{0}', space=vmem, size = 0x1000, scoped, tag = 'output window, operand 0, single buffered']
    #allocation8 [shape = 'u8[4096]{0}', space=vmem, size = 0x1000, scoped, tag = 'output window, operand 1, single buffered']
    #allocation9 [shape = 's32[1]{0}', space=sflag, size = 0x4, scoped, tag = 'scoped memory for tpu_custom_call.1']
    %10 = vsyncpa [#allocation3], 0
    %11 = vsyncpa [#allocation6], 0
    %12 = vsyncpa [#allocation4], 0
    %13 = vsyncpa [#allocation9], 0
    // Predicated region
    $region2: #{tpu_custom_call.1} parent=1 // pred_check
      _
    $region3: #{tpu_custom_call.1} parent=1 // pred_check_branch
      %15 = sbr.rel (0) target = $region5
    $region4: #{tpu_custom_call.1} parent=1 // pred_region
      %s17 = ssub.s32 128, 128
      %18 = vsyncadd [#allocation3], %s17
      %s20 = sshll.u32 [#allocation2], 4
      %s21 = int_to_ptr.vmem [resolvable:$true] %s20
      %23 = dma.hbm_to_vmem [thread:$0]  %s0, 128, %s21, [#allocation3]
    $region5: #{tpu_custom_call.1} parent=1 // pred_fallthru
      _
    // Predicated region
    $region6: #{tpu_custom_call.1} parent=1 // pred_check
      _
    $region7: #{tpu_custom_call.1} parent=1 // pred_check_branch
      %25 = sbr.rel (0) target = $region9
    $region8: #{tpu_custom_call.1} parent=1 // pred_region
      %s27 = ssub.s32 2048, 2048
      %28 = vsyncadd [#allocation6], %s27
      %s29 = sshll.u32 [#allocation5], 4
      %s30 = int_to_ptr.vmem [resolvable:$true] %s29
      %35 = dma.hbm_to_vmem [thread:$0]  %s1, 2048, %s30, [#allocation6], 128, 128, 8
    $region9: #{tpu_custom_call.1} parent=1 // pred_fallthru
      _
    // Predicated region
    $region10: #{tpu_custom_call.1} parent=1 // pred_check
      _
    $region11: #{tpu_custom_call.1} parent=1 // pred_check_branch
      %37 = sbr.rel (0) target = $region13
    $region12: #{tpu_custom_call.1} parent=1 // pred_region
      _
    $region13: #{tpu_custom_call.1} parent=1 // pred_fallthru
      _
    // Predicated region
    $region14: #{tpu_custom_call.1} parent=1 // pred_check
      _
    $region15: #{tpu_custom_call.1} parent=1 // pred_check_branch
      %39 = sbr.rel (0) target = $region17
    $region16: #{tpu_custom_call.1} parent=1 // pred_region
      %40 = dma.done [#allocation3], 128
    $region17: #{tpu_custom_call.1} parent=1 // pred_fallthru
      _
    // Predicated region
    $region18: #{tpu_custom_call.1} parent=1 // pred_check
      _
    $region19: #{tpu_custom_call.1} parent=1 // pred_check_branch
      %42 = sbr.rel (0) target = $region21
    $region20: #{tpu_custom_call.1} parent=1 // pred_region
      %43 = dma.done [#allocation6], 2048
    $region21: #{tpu_custom_call.1} parent=1 // pred_fallthru
      _
    %v44 = vld [vmem:[#allocation2] sm:$0xff]
    %v45 = vld [vmem:[#allocation5] sm:$0xff]
    %v46 = vld [vmem:[#allocation5 + $0x8] sm:$0xff]
    %v47 = vld [vmem:[#allocation5 + $0x10] sm:$0xff]
    %v48 = vld [vmem:[#allocation5 + $0x18] sm:$0xff]
    %v49 = vld [vmem:[#allocation5 + $0x20] sm:$0xff]
    %v50 = vld [vmem:[#allocation5 + $0x28] sm:$0xff]
    %v51 = vld [vmem:[#allocation5 + $0x30] sm:$0xff]
    %v52 = vld [vmem:[#allocation5 + $0x38] sm:$0xff]
    %v53 = vld [vmem:[#allocation5 + $0x40] sm:$0xff]
    %v54 = vld [vmem:[#allocation5 + $0x48] sm:$0xff]
    %v55 = vld [vmem:[#allocation5 + $0x50] sm:$0xff]
    %v56 = vld [vmem:[#allocation5 + $0x58] sm:$0xff]
    %v57 = vld [vmem:[#allocation5 + $0x60] sm:$0xff]
    %v58 = vld [vmem:[#allocation5 + $0x68] sm:$0xff]
    %v59 = vld [vmem:[#allocation5 + $0x70] sm:$0xff]
    %v60 = vld [vmem:[#allocation5 + $0x78] sm:$0xff]
    %v61 = vld [vmem:[%s2] sm:$0x1]
    %v63 = vlaneseq
    %v64 = vshrl.u32 %v63, 7
    %v65 = vsub.s32 0, %v64
    %v66 = vrot.slane %v61, %v65
    %68 = vmatprep.subr.mxu0 0.0
    %69 = vmatpush1.msra.mxu0 %v45
    %70 = vmatprep.subr.mxu0 0.0
    %71 = vmatpush1.msra.mxu0 %v46
    %72 = vmatprep.subr.mxu0 0.0
    %73 = vmatpush1.msra.mxu0 %v47
    %74 = vmatprep.subr.mxu0 0.0
    %75 = vmatpush1.msra.mxu0 %v48
    %76 = vmatprep.subr.mxu0 0.0
    %77 = vmatpush1.msra.mxu0 %v49
    %78 = vmatprep.subr.mxu0 0.0
    %79 = vmatpush1.msra.mxu0 %v50
    %80 = vmatprep.subr.mxu0 0.0
    %81 = vmatpush1.msra.mxu0 %v51
    %82 = vmatprep.subr.mxu0 0.0
    %83 = vmatpush1.msra.mxu0 %v52
    %84 = vmatprep.subr.mxu0 0.0
    %85 = vmatpush1.msra.mxu0 %v53
    %86 = vmatprep.subr.mxu0 0.0
    %87 = vmatpush1.msra.mxu0 %v54
    %88 = vmatprep.subr.mxu0 0.0
    %89 = vmatpush1.msra.mxu0 %v55
    %90 = vmatprep.subr.mxu0 0.0
    %91 = vmatpush1.msra.mxu0 %v56
    %92 = vmatprep.subr.mxu0 0.0
    %93 = vmatpush1.msra.mxu0 %v57
    %94 = vmatprep.subr.mxu0 0.0
    %95 = vmatpush1.msra.mxu0 %v58
    %96 = vmatprep.subr.mxu0 0.0
    %97 = vmatpush1.msra.mxu0 %v59
    %98 = vmatprep.subr.mxu0 0.0
    %99 = vmatpush1.msra.mxu0 %v60
    %100 = vmatprep.subr.mxu0 0.0
    %101 = vmatpush1.msra.mxu0 0.0
    %102 = vmatprep.subr.mxu0 0.0
    %103 = vmatpush1.msra.mxu0 0.0
    %104 = vmatprep.subr.mxu0 0.0
    %105 = vmatpush1.msra.mxu0 0.0
    %106 = vmatprep.subr.mxu0 0.0
    %107 = vmatpush1.msra.mxu0 0.0
    %108 = vmatprep.subr.mxu0 0.0
    %109 = vmatpush1.msra.mxu0 0.0
    %110 = vmatprep.subr.mxu0 0.0
    %111 = vmatpush1.msra.mxu0 0.0
    %112 = vmatprep.subr.mxu0 0.0
    %113 = vmatpush1.msra.mxu0 0.0
    %114 = vmatprep.subr.mxu0 0.0
    %115 = vmatpush1.msra.mxu0 0.0
    %116 = vmatprep.subr.mxu0 0.0
    %117 = vmatpush1.msra.mxu0 0.0
    %118 = vmatprep.subr.mxu0 0.0
    %119 = vmatpush1.msra.mxu0 0.0
    %120 = vmatprep.subr.mxu0 0.0
    %121 = vmatpush1.msra.mxu0 0.0
    %122 = vmatprep.subr.mxu0 0.0
    %123 = vmatpush1.msra.mxu0 0.0
    %124 = vmatprep.subr.mxu0 0.0
    %125 = vmatpush1.msra.mxu0 0.0
    %126 = vmatprep.subr.mxu0 0.0
    %127 = vmatpush1.msra.mxu0 0.0
    %128 = vmatprep.subr.mxu0 0.0
    %129 = vmatpush1.msra.mxu0 0.0
    %130 = vmatprep.subr.mxu0 0.0
    %131 = vmatpush1.msra.mxu0 0.0
    %132 = vmatprep.mubr.f32.mxu0 0.0
    %133 = vmatmul.mubr.f32.gmra.mrb[0].mxu0 %v44
    %v134 = vpop.f32.mrb[0].mxu0
    %v135 = vadd.f32 %v66, %v134
    %v136 = vpop.f32.mrb[0].mxu0
    %137 = vdwg.mxu0
    %138 = vst [vmem:[#allocation7] sm:$0xff] %v135
    %v139 = vxor.u32 %v135, 2147483648
    %v140 = vmul.f32 %v139, 1.442695
    %v141 = vpow.pop %v140
    %v142 = vadd.f32 %v141, 1.0
    %v143 = vrcp.pop %v142
    %v144 = vmul.f32 1.0, %v143
    %145 = vst [vmem:[#allocation8] sm:$0xff] %v144
    // Predicated region
    $region22: #{tpu_custom_call.1} parent=1 // pred_check
      _
    $region23: #{tpu_custom_call.1} parent=1 // pred_check_branch
      %147 = sbr.rel (0) target = $region25
    $region24: #{tpu_custom_call.1} parent=1 // pred_region
      %s149 = ssub.s32 128, 128
      %150 = vsyncadd [#allocation4], %s149
      %s152 = sshll.u32 [#allocation7], 4
      %s153 = int_to_ptr.vmem [resolvable:$true] %s152
      %155 = dma.vmem_to_hbm [thread:$0]  %s153, 128, %s3, [#allocation4]
    $region25: #{tpu_custom_call.1} parent=1 // pred_fallthru
      _
    // Predicated region
    $region26: #{tpu_custom_call.1} parent=1 // pred_check
      _
    $region27: #{tpu_custom_call.1} parent=1 // pred_check_branch
      %157 = sbr.rel (0) target = $region29
    $region28: #{tpu_custom_call.1} parent=1 // pred_region
      %s159 = ssub.s32 128, 128
      %160 = vsyncadd [#allocation9], %s159
      %s162 = sshll.u32 [#allocation8], 4
      %s163 = int_to_ptr.vmem [resolvable:$true] %s162
      %165 = dma.vmem_to_hbm [thread:$0]  %s163, 128, %s4, [#allocation9]
    $region29: #{tpu_custom_call.1} parent=1 // pred_fallthru
      _
    // Predicated region
    $region30: #{tpu_custom_call.1} parent=1 // pred_check
      _
    $region31: #{tpu_custom_call.1} parent=1 // pred_check_branch
      %167 = sbr.rel (0) target = $region33
    $region32: #{tpu_custom_call.1} parent=1 // pred_region
      %168 = dma.done [#allocation4], 128
    $region33: #{tpu_custom_call.1} parent=1 // pred_fallthru
      _
    // Predicated region
    $region34: #{tpu_custom_call.1} parent=1 // pred_check
      _
    $region35: #{tpu_custom_call.1} parent=1 // pred_check_branch
      %170 = sbr.rel (0) target = $region37
    $region36: #{tpu_custom_call.1} parent=1 // pred_region
      %171 = dma.done [#allocation9], 128
    $region37: #{tpu_custom_call.1} parent=1 // pred_fallthru
      _
    %172 = vsyncpa [#allocation3], 1
    %173 = vsyncpa [#allocation6], 1
    %174 = vsyncpa [#allocation4], 1
    %175 = vsyncpa [#allocation9], 1

</llo_original>
